<compile_context>
chip_gen: v5e
topology: v5e:2x2
jax: 0.10.0
libtpu: 0.0.40
codegen_flags: <defaults>
</compile_context>

<pallas_src>
import functools
import math

import jax
import jax.numpy as jnp
from jax import lax
from jax.experimental import pallas as pl
from jax.experimental.pallas import tpu as pltpu


_LN2 = math.log(2.0)
_MIN_PALLAS_ELEMS = 4096       # below this, fused XLA beats kernel launch overhead
_DEFAULT_TILE_ROWS = 2048      # ~2048 x 128 x 4B = 1 MiB per f32 input buffer
_MAX_PATTERN_ROWS = 4096       # give up on the resident q-pattern beyond this


def _round_up(x, m):
    return ((x + m - 1) // m) * m


def _cdiv(a, b):
    return -(-a // b)


def _lcm(a, b):
    return a * b // math.gcd(a, b)


def _smooth_pinball_jnp(pred, target, quantiles, alpha):
    """Pure-jnp reference / tiny-problem fast path (matches PyTorch forward)."""
    pred = pred.astype(jnp.float32)
    target = target.astype(jnp.float32)
    error = target - pred
    beta = 1.0 / alpha
    x = -error
    bx = beta * x
    soft = jnp.where(bx > 20.0, x,
                     jnp.log1p(jnp.exp(jnp.minimum(bx, 20.0))) * (1.0 / beta))
    losses = quantiles[None, :].astype(jnp.float32) * error + soft
    return jnp.mean(jnp.sum(losses, axis=1))


def _smooth_pinball_kernel(pred_ref, target_ref, qpat_ref, out_ref, *,
                           beta, total_rows, rows_per_tile, chunk_rows,
                           num_chunks, num_tiles, needs_mask):
    """One grid step: reduce a (rows_per_tile, 128) tile to an (8,128) partial sum."""
    tile = pl.program_id(0)
    inv_beta = 1.0 / beta

    def tile_partial(masked):
        if masked:
            # Row-level validity only (the last real row's zero pads are handled
            # by a constant correction in the wrapper).  Row counts are small,
            # so there is no int32-overflow risk for huge inputs.
            row_ids = lax.broadcasted_iota(jnp.int32, (chunk_rows, 128), 0)
            rows_before_tile = tile * rows_per_tile

        def chunk_partial(c, acc):
            start = c * chunk_rows
            if not isinstance(start, int):
                start = pl.multiple_of(start, chunk_rows)
            sl = pl.ds(start, chunk_rows)

            pred = pred_ref[sl, :].astype(jnp.float32)      # (chunk_rows, 128)
            targ = target_ref[sl, :].astype(jnp.float32)
            q = qpat_ref[sl, :]                              # resident f32 pattern

            error = targ - pred
            # PyTorch F.softplus(-error, beta) with its default threshold=20.
            x = -error
            bx = beta * x
            soft = jnp.where(bx > 20.0, x,
                             jnp.log1p(jnp.exp(jnp.minimum(bx, 20.0))) * inv_beta)
            losses = q * error + soft

            if masked:
                limit = (total_rows - rows_before_tile) - c * chunk_rows
                losses = jnp.where(row_ids < limit, losses, 0.0)

            # (chunk_rows, 128) -> (chunk_rows//8, 8, 128) is layout-free (groups
            # of 8 sublane rows); sum over the leading dim is pure VPU adds.
            return acc + losses.reshape(chunk_rows // 8, 8, 128).sum(axis=0)

        acc0 = jnp.zeros((8, 128), jnp.float32)
        if num_chunks == 1:
            return chunk_partial(0, acc0)
        return lax.fori_loop(0, num_chunks, chunk_partial, acc0)

    if not needs_mask:
        # All tiles are full (and any zero pads are wrapper-corrected): no mask.
        out_ref[0] = tile_partial(False)
    elif num_tiles == 1:
        out_ref[0] = tile_partial(True)
    else:
        last = num_tiles - 1

        @pl.when(tile != last)
        def _():
            out_ref[0] = tile_partial(False)

        @pl.when(tile == last)
        def _():
            out_ref[0] = tile_partial(True)


def smooth_pinball_loss(pred, target, quantiles, alpha=0.01, *,
                        max_tile_rows=_DEFAULT_TILE_ROWS):
    """Pallas implementation of SmoothPinballLoss.forward.

    pred, target: (B, Q) arrays (any float dtype). quantiles: (Q,) array.
    Returns a scalar float32 loss.
    """
    pred = jnp.asarray(pred)
    target = jnp.asarray(target)
    quantiles = jnp.asarray(quantiles, jnp.float32)

    if pred.ndim != 2:
        raise ValueError("smooth_pinball_loss expects (batch, num_quantiles) inputs")
    B, Q = pred.shape
    if target.shape != (B, Q):
        raise ValueError(f"target shape {target.shape} != pred shape {(B, Q)}")
    if quantiles.shape != (Q,):
        raise ValueError(f"quantiles shape {quantiles.shape} != ({Q},)")

    if pred.dtype != target.dtype:
        dt = jnp.promote_types(pred.dtype, target.dtype)
        pred = pred.astype(dt)
        target = target.astype(dt)

    n = B * Q
    if n < _MIN_PALLAS_ELEMS:
        # Tiny problem: kernel launch/pipeline overhead dominates; use fused XLA.
        return _smooth_pinball_jnp(pred, target, quantiles, alpha)

    itemsize = pred.dtype.itemsize
    pack = max(8, 32 // itemsize)            # packed sublane rows: f32=8, bf16=16, int8=32
    chunk_rows = 8 * pack                    # in-kernel streaming chunk (64/128/256 rows)
    period_rows = Q // math.gcd(Q, 128)      # q pattern period along the row axis
    tile_quantum = _lcm(chunk_rows, period_rows)
    if tile_quantum > _MAX_PATTERN_ROWS:
        # TODO(synk): very large / awkward Q would need an in-kernel (iota % Q)
        # quantile gather instead of a resident pattern tile; fall back to XLA.
        return _smooth_pinball_jnp(pred, target, quantiles, alpha)

    # ---- lane-dense layout: (B, Q) -> (total_rows, 128), minimal padding -----
    n128 = _round_up(n, 128)
    total_rows = n128 // 128
    pred_flat = pred.reshape(-1)
    target_flat = target.reshape(-1)
    if n128 != n:
        # Ragged tail only: pad by < 128 zeros (each contributes exactly
        # softplus(0)/beta = alpha*ln2; subtracted below).  Aligned shapes take
        # the free-bitcast path with zero host-side copies.
        pad = n128 - n
        pred_flat = jnp.pad(pred_flat, (0, pad))
        target_flat = jnp.pad(target_flat, (0, pad))
    pred2d = pred_flat.reshape(total_rows, 128)
    target2d = target_flat.reshape(total_rows, 128)

    # ---- tile-size selection --------------------------------------------------
    one_tile_rows = _round_up(total_rows, chunk_rows)
    if one_tile_rows <= max(tile_quantum, _round_up(max_tile_rows, chunk_rows)):
        # Small problem: one tile covering everything (partial block rows masked).
        rows_per_tile = one_tile_rows
    else:
        # Multi-tile: tile stride must be a multiple of the q-pattern period so
        # one resident pattern serves every tile; cap so the grid has >= 2 tiles
        # (lets v7x's two TensorCores split the "parallel" grid axis).
        target_rows = _round_up(max_tile_rows, tile_quantum)
        half_rows = _round_up(_cdiv(total_rows, 2), tile_quantum)
        rows_per_tile = max(tile_quantum, min(target_rows, half_rows))
    num_tiles = _cdiv(total_rows, rows_per_tile)
    num_chunks = rows_per_tile // chunk_rows
    needs_mask = (total_rows % rows_per_tile) != 0   # only the last tile has OOB rows

    # One tile's worth of the periodic quantile pattern (resident, DMA'd once).
    pat_elems = rows_per_tile * 128
    reps = _cdiv(pat_elems, Q)
    q_pattern = jnp.tile(quantiles, reps)[:pat_elems].reshape(rows_per_tile, 128)

    kernel = functools.partial(
        _smooth_pinball_kernel,
        beta=1.0 / float(alpha),
        total_rows=total_rows,
        rows_per_tile=rows_per_tile,
        chunk_rows=chunk_rows,
        num_chunks=num_chunks,
        num_tiles=num_tiles,
        needs_mask=needs_mask,
    )

    cost = pl.CostEstimate(
        flops=8 * n,
        transcendentals=2 * n,                          # exp + log1p per element
        bytes_accessed=int(2 * n128 * itemsize + pat_elems * 4
                           + num_tiles * 8 * 128 * 4),
    )

    partials = pl.pallas_call(
        kernel,
        out_shape=jax.ShapeDtypeStruct((num_tiles, 8, 128), jnp.float32),
        grid=(num_tiles,),
        in_specs=[
            pl.BlockSpec((rows_per_tile, 128), lambda i: (i, 0)),
            pl.BlockSpec((rows_per_tile, 128), lambda i: (i, 0)),
            pl.BlockSpec((rows_per_tile, 128), lambda i: (0, 0)),  # resident q pattern
        ],
        out_specs=pl.BlockSpec((1, 8, 128), lambda i: (i, 0, 0)),
        compiler_params=pltpu.CompilerParams(
            dimension_semantics=("parallel",),
            vmem_limit_bytes=32 * 1024 * 1024,
        ),
        cost_estimate=cost,
    )(pred2d, target2d, q_pattern)

    # Finish the tiny reduction; remove the exact contribution of the (< 128)
    # zero-padded tail elements; mean_b(sum_q) == sum_all / B.
    total = jnp.sum(partials)
    pad_correction = (n128 - n) * float(alpha) * _LN2
    return (total - pad_correction) / jnp.float32(B)


class SmoothPinballLoss:
    """Drop-in functional analogue of the PyTorch module."""

    def __init__(self, quantiles, alpha=0.01):
        self.quantiles = jnp.asarray(quantiles, jnp.float32)
        self.alpha = float(alpha)

    def __call__(self, pred, target):
        return smooth_pinball_loss(pred, target, self.quantiles, self.alpha)


if __name__ == "__main__":
    root = jax.random.PRNGKey(0)
    k1, k2, k3, k4, k5, k6 = jax.random.split(root, 6)
    alpha = 0.01

    # Case 1: f32, lane-aligned (B*Q % 128 == 0) -> zero host-side copies, no mask.
    B1, Q1 = 2048, 5
    q1 = jnp.array([0.05, 0.25, 0.50, 0.75, 0.95], dtype=jnp.float32)
    p1 = jax.random.normal(k1, (B1, Q1), dtype=jnp.float32)
    t1 = jax.random.normal(k2, (B1, Q1), dtype=jnp.float32)
    loss_fn = SmoothPinballLoss(q1, alpha=alpha)
    out1 = jax.block_until_ready(loss_fn(p1, t1))
    ref1 = _smooth_pinball_jnp(p1, t1, q1, alpha)
    assert jnp.allclose(out1, ref1, rtol=1e-5, atol=5e-5), (out1, ref1)

    # Case 2: bf16, ragged tail (minimal pad + last-tile row mask + constant
    # correction), dtype-aware 16-row sublane packing, single tile.
    B2, Q2 = 1200, 7
    q2 = jnp.linspace(0.1, 0.9, Q2, dtype=jnp.float32)
    p2 = jax.random.normal(k3, (B2, Q2), dtype=jnp.bfloat16)
    t2 = jax.random.normal(k4, (B2, Q2), dtype=jnp.bfloat16)
    out2 = jax.block_until_ready(smooth_pinball_loss(p2, t2, q2, alpha=alpha))
    ref2 = _smooth_pinball_jnp(p2, t2, q2, alpha)
    assert jnp.allclose(out2, ref2, rtol=1e-4, atol=1e-4), (out2, ref2)

    # Case 3: f32 multi-tile with a partial last tile (small max_tile_rows forces
    # >= 2 tiles): exercises the unmasked interior path, the fori_loop chunk
    # streaming, the masked last tile, and the pad correction together.
    B3, Q3 = 13000, 5
    q3 = jnp.array([0.05, 0.25, 0.50, 0.75, 0.95], dtype=jnp.float32)
    p3 = jax.random.normal(k5, (B3, Q3), dtype=jnp.float32)
    t3 = jax.random.normal(k6, (B3, Q3), dtype=jnp.float32)
    out3 = jax.block_until_ready(
        smooth_pinball_loss(p3, t3, q3, alpha=alpha, max_tile_rows=256))
    ref3 = _smooth_pinball_jnp(p3, t3, q3, alpha)
    assert jnp.allclose(out3, ref3, rtol=1e-5, atol=5e-5), (out3, ref3)

    print("KERNEL_OK")
</pallas_src>

<mosaic_0001>
module attributes {stable_mosaic.version = 11 : i64} {
  func.func @_smooth_pinball_kernel(%arg0: i32, %arg1: memref<128x128xf32, #tpu.memory_space<vmem>>, %arg2: memref<128x128xf32, #tpu.memory_space<vmem>>, %arg3: memref<128x128xf32, #tpu.memory_space<vmem>>, %arg4: memref<1x8x128xf32, #tpu.memory_space<vmem>>) attributes {dimension_semantics = [#tpu.dimension_semantics<parallel>], iteration_bounds = array<i64: 1>, scalar_prefetch = 0 : i64, scratch_operands = 0 : i64, tpu.core_type = #tpu.core_type<tc>, window_params = [{transform_indices = @transform_0, window_bounds = array<i64: 128, 128>}, {transform_indices = @transform_1, window_bounds = array<i64: 128, 128>}, {pipeline_mode = #tpu.pipeline_mode<synchronous>, transform_indices = @transform_2, window_bounds = array<i64: 128, 128>}, {transform_indices = @transform_3, window_bounds = array<i64: 1, 8, 128>}]} {
    %0 = tpu.iota {dimensions = array<i32: 0>} : vector<64x128xi32>
    %c128_i32 = arith.constant 128 : i32
    %1 = arith.muli %arg0, %c128_i32 : i32
    %cst = arith.constant 0.000000e+00 : f32
    %2 = vector.broadcast %cst : f32 to vector<8x128xf32>
    %c0_i32 = arith.constant 0 : i32
    %c2_i32 = arith.constant 2 : i32
    %3 = arith.addi %c0_i32, %c2_i32 : i32
    %c1_i32 = arith.constant 1 : i32
    %4 = scf.for %arg5 = %c0_i32 to %3 step %c1_i32 iter_args(%arg6 = %2) -> (vector<8x128xf32>)  : i32 {
      %c64_i32 = arith.constant 64 : i32
      %8 = arith.muli %arg5, %c64_i32 : i32
      %9 = tpu.assume_multiple %8, 64 : i32
      %10 = arith.index_cast %9 : i32 to index
      %c0_3 = arith.constant 0 : index
      %11 = vector.load %arg1[%10, %c0_3] : memref<128x128xf32, #tpu.memory_space<vmem>>, vector<64x128xf32>
      %12 = arith.index_cast %9 : i32 to index
      %c0_4 = arith.constant 0 : index
      %13 = vector.load %arg2[%12, %c0_4] : memref<128x128xf32, #tpu.memory_space<vmem>>, vector<64x128xf32>
      %14 = arith.index_cast %9 : i32 to index
      %c0_5 = arith.constant 0 : index
      %15 = vector.load %arg3[%14, %c0_5] : memref<128x128xf32, #tpu.memory_space<vmem>>, vector<64x128xf32>
      %16 = arith.subf %13, %11 : vector<64x128xf32>
      %cst_6 = arith.constant 0.000000e+00 : f32
      %17 = vector.broadcast %cst_6 : f32 to vector<64x128xf32>
      %18 = arith.subf %17, %16 : vector<64x128xf32>
      %cst_7 = arith.constant 1.000000e+02 : f32
      %19 = vector.broadcast %cst_7 : f32 to vector<64x128xf32>
      %20 = arith.mulf %19, %18 : vector<64x128xf32>
      %cst_8 = arith.constant 2.000000e+01 : f32
      %21 = vector.broadcast %cst_8 : f32 to vector<64x128xf32>
      %22 = arith.cmpf ogt, %20, %21 : vector<64x128xf32>
      %cst_9 = arith.constant 2.000000e+01 : f32
      %23 = vector.broadcast %cst_9 : f32 to vector<64x128xf32>
      %24 = arith.minimumf %20, %23 : vector<64x128xf32>
      %25 = math.exp %24 : vector<64x128xf32>
      %26 = math.log1p %25 : vector<64x128xf32>
      %cst_10 = arith.constant 0.00999999977 : f32
      %27 = vector.broadcast %cst_10 : f32 to vector<64x128xf32>
      %28 = arith.mulf %26, %27 : vector<64x128xf32>
      %29 = arith.select %22, %18, %28 : vector<64x128xi1>, vector<64x128xf32>
      %30 = arith.mulf %15, %16 : vector<64x128xf32>
      %31 = arith.addf %30, %29 : vector<64x128xf32>
      %c80_i32 = arith.constant 80 : i32
      %32 = arith.subi %c80_i32, %1 : i32
      %c64_i32_11 = arith.constant 64 : i32
      %33 = arith.muli %arg5, %c64_i32_11 : i32
      %34 = arith.subi %32, %33 : i32
      %35 = vector.broadcast %34 : i32 to vector<64x128xi32>
      %36 = arith.cmpi slt, %0, %35 : vector<64x128xi32>
      %cst_12 = arith.constant 0.000000e+00 : f32
      %37 = vector.broadcast %cst_12 : f32 to vector<64x128xf32>
      %38 = arith.select %36, %31, %37 : vector<64x128xi1>, vector<64x128xf32>
      %39 = vector.shape_cast %38 : vector<64x128xf32> to vector<8x8x128xf32>
      %cst_13 = arith.constant dense<0.000000e+00> : vector<8x128xf32>
      %40 = vector.multi_reduction <add>, %39, %cst_13 [0] : vector<8x8x128xf32> to vector<8x128xf32>
      %41 = arith.addf %arg6, %40 : vector<8x128xf32>
      scf.yield %41 : vector<8x128xf32>
    }
    %c2_i32_0 = arith.constant 2 : i32
    %c0 = arith.constant 0 : index
    %c0_1 = arith.constant 0 : index
    %c0_2 = arith.constant 0 : index
    %5 = vector.load %arg4[%c0, %c0_1, %c0_2] : memref<1x8x128xf32, #tpu.memory_space<vmem>>, vector<1x8x128xf32>
    %6 = vector.shape_cast %5 : vector<1x8x128xf32> to vector<8x128xf32>
    %7 = vector.shape_cast %4 : vector<8x128xf32> to vector<1x8x128xf32>
    tpu.vector_store %arg4[%c0, %c0_1, %c0_2], %7 {strides = array<i32>} : memref<1x8x128xf32, #tpu.memory_space<vmem>>, vector<1x8x128xf32>,
    return
  }
  func.func @transform_0(%arg0: i32) -> (i32, i32) {
    %c0_i32 = arith.constant 0 : i32
    %c0_i32_0 = arith.constant 0 : i32
    return %arg0, %c0_i32 : i32, i32
  }
  func.func @transform_1(%arg0: i32) -> (i32, i32) {
    %c0_i32 = arith.constant 0 : i32
    %c0_i32_0 = arith.constant 0 : i32
    return %arg0, %c0_i32 : i32, i32
  }
  func.func @transform_2(%arg0: i32) -> (i32, i32) {
    %c0_i32 = arith.constant 0 : i32
    %c0_i32_0 = arith.constant 0 : i32
    %c0_i32_1 = arith.constant 0 : i32
    return %c0_i32, %c0_i32_0 : i32, i32
  }
  func.func @transform_3(%arg0: i32) -> (i32, i32, i32) {
    %c0_i32 = arith.constant 0 : i32
    %c0_i32_0 = arith.constant 0 : i32
    %c0_i32_1 = arith.constant 0 : i32
    return %arg0, %c0_i32, %c0_i32_0 : i32, i32, i32
  }
}

</mosaic_0001>

<llo_original>
// kernel: tpu_custom_call.1
$region0: #{tpu_custom_call.1}
  #allocation0 [shape = 'u32[]', space=smem, size = 0x4, offset = 0x4, fixed_abs, tag = 'smem constant byte address 0x4 - core index']
  #allocation1 [shape = 'u32[72,128]{1,0:T(1,128)}', space=vmem, size = 0x9000, scoped, tag = 'internal scratch']
  %s0 = inlined_call_operand.hbm [shape: f32[80,128], index: 0, kind: input, shape index: {}]
  %s1 = inlined_call_operand.hbm [shape: f32[80,128], index: 1, kind: input, shape index: {}]
  %s2 = inlined_call_operand.hbm [shape: f32[128,128], index: 2, kind: input, shape index: {}]
  %s3 = inlined_call_operand.hbm [shape: f32[1,8,128], index: 3, kind: output, shape index: {}]
  %s4 = sld [smem:[#allocation0]]
  $region41: #{tpu_custom_call.1} parent=0
    _
  %s6 = ssub.s32 1, %s4
  %s7 = scalar_select 0, %s6, %s4
  $region1: #{tpu_custom_call.1} parent=0
    #allocation2 [shape = 'u8[65536]{0}', space=vmem, size = 0x10000, scoped, tag = 'input window, operand 0, single buffered']
    #allocation3 [shape = 's32[1]{0}', space=sflag, size = 0x4, scoped, tag = 'scoped memory for tpu_custom_call.1']
    #allocation4 [shape = 's32[1]{0}', space=sflag, size = 0x4, scoped, tag = 'scoped memory for tpu_custom_call.1']
    #allocation5 [shape = 'u8[65536]{0}', space=vmem, size = 0x10000, scoped, tag = 'input window, operand 1, single buffered']
    #allocation6 [shape = 's32[1]{0}', space=sflag, size = 0x4, scoped, tag = 'scoped memory for tpu_custom_call.1']
    #allocation7 [shape = 'u8[65536]{0}', space=vmem, size = 0x10000, scoped, tag = 'input window, operand 2, single buffered']
    #allocation8 [shape = 'u8[4096]{0}', space=vmem, size = 0x1000, scoped, tag = 'output window, operand 0, single buffered']
    %8 = vsyncpa [#allocation3], 0
    %9 = vsyncpa [#allocation6], 0
    %10 = vsyncpa [#allocation4], 0
    // Predicated region
    $region2: #{tpu_custom_call.1} parent=1 // pred_check
      _
    $region3: #{tpu_custom_call.1} parent=1 // pred_check_branch
      %12 = sbr.rel (0) target = $region5
    $region4: #{tpu_custom_call.1} parent=1 // pred_region
      %14 = vsyncadd [#allocation3], 768
      %s15 = sshll.u32 %s0, 4
      %s16 = int_to_ptr.hbm [resolvable:$true] %s15
      %s17 = sshll.u32 [#allocation2], 4
      %s18 = int_to_ptr.vmem [resolvable:$true] %s17
      %23 = dma.hbm_to_vmem [thread:$0]  %s16, 1280, %s18, [#allocation3], 128, 128, 8
    $region5: #{tpu_custom_call.1} parent=1 // pred_fallthru
      _
    // Predicated region
    $region6: #{tpu_custom_call.1} parent=1 // pred_check
      _
    $region7: #{tpu_custom_call.1} parent=1 // pred_check_branch
      %25 = sbr.rel (0) target = $region9
    $region8: #{tpu_custom_call.1} parent=1 // pred_region
      %27 = vsyncadd [#allocation6], 768
      %s28 = sshll.u32 %s1, 4
      %s29 = int_to_ptr.hbm [resolvable:$true] %s28
      %s30 = sshll.u32 [#allocation5], 4
      %s31 = int_to_ptr.vmem [resolvable:$true] %s30
      %36 = dma.hbm_to_vmem [thread:$0]  %s29, 1280, %s31, [#allocation6], 128, 128, 8
    $region9: #{tpu_custom_call.1} parent=1 // pred_fallthru
      _
    // Predicated region
    $region10: #{tpu_custom_call.1} parent=1 // pred_check
      _
    $region11: #{tpu_custom_call.1} parent=1 // pred_check_branch
      %38 = sbr.rel (0) target = $region13
    $region12: #{tpu_custom_call.1} parent=1 // pred_region
      %40 = vsyncadd [#allocation6], 0
      %s41 = sshll.u32 %s2, 4
      %s42 = int_to_ptr.hbm [resolvable:$true] %s41
      %s43 = sshll.u32 [#allocation7], 4
      %s44 = int_to_ptr.vmem [resolvable:$true] %s43
      %49 = dma.hbm_to_vmem [thread:$0]  %s42, 2048, %s44, [#allocation6], 128, 128, 8
    $region13: #{tpu_custom_call.1} parent=1 // pred_fallthru
      _
    // Predicated region
    $region14: #{tpu_custom_call.1} parent=1 // pred_check
      _
    $region15: #{tpu_custom_call.1} parent=1 // pred_check_branch
      %51 = sbr.rel (0) target = $region17
    $region16: #{tpu_custom_call.1} parent=1 // pred_region
      %53 = dma.done [#allocation3], 2048
    $region17: #{tpu_custom_call.1} parent=1 // pred_fallthru
      _
    // Predicated region
    $region18: #{tpu_custom_call.1} parent=1 // pred_check
      _
    $region19: #{tpu_custom_call.1} parent=1 // pred_check_branch
      %55 = sbr.rel (0) target = $region21
    $region20: #{tpu_custom_call.1} parent=1 // pred_region
      %57 = dma.done [#allocation6], 2048
    $region21: #{tpu_custom_call.1} parent=1 // pred_fallthru
      _
    // Predicated region
    $region22: #{tpu_custom_call.1} parent=1 // pred_check
      _
    $region23: #{tpu_custom_call.1} parent=1 // pred_check_branch
      %59 = sbr.rel (0) target = $region25
    $region24: #{tpu_custom_call.1} parent=1 // pred_region
      %61 = dma.done [#allocation6], 2048
    $region25: #{tpu_custom_call.1} parent=1 // pred_fallthru
      _
    %v62 = vlaneseq
    %v63 = vshrl.u32 %v62, 7
    %v64 = vadd.s32 %v63, 8
    %v65 = vadd.s32 %v63, 16
    %v66 = vadd.s32 %v63, 24
    %v67 = vadd.s32 %v63, 32
    %v68 = vadd.s32 %v63, 40
    %v69 = vadd.s32 %v63, 48
    %v70 = vadd.s32 %v63, 56
    %s71 = smul.u32 0, 128
    loop: start=0, step=1, limit=2
    $region26: #{tpu_custom_call.1} parent=1 // loop_pre_header
      _
    $region27: #{tpu_custom_call.1} parent=1 // loop_header
      %s73 = sphi 0, %s77
      %p74 = scmp.ge.s32.totalorder %s73, 2
      %v78 = vphi 0.0, %v293
    $region28: #{tpu_custom_call.1} parent=1 // loop_header_branch
      %76 = sbr.rel (%p74) target = $region32
    $region29: #{tpu_custom_call.1} parent=1 // loop_body
      %s79 = smul.u32 %s73, 64
      %s80 = scalar_lea.vmem [#allocation2], %s79
      %v81 = vld [vmem:[%s80] sm:$0xff]
      %v82 = vld [vmem:[%s80 + $0x8] sm:$0xff]
      %v83 = vld [vmem:[%s80 + $0x10] sm:$0xff]
      %v84 = vld [vmem:[%s80 + $0x18] sm:$0xff]
      %v85 = vld [vmem:[%s80 + $0x20] sm:$0xff]
      %v86 = vld [vmem:[%s80 + $0x28] sm:$0xff]
      %v87 = vld [vmem:[%s80 + $0x30] sm:$0xff]
      %v88 = vld [vmem:[%s80 + $0x38] sm:$0xff]
      %s89 = scalar_lea.vmem [#allocation5], %s79
      %v90 = vld [vmem:[%s89] sm:$0xff]
      %v91 = vld [vmem:[%s89 + $0x8] sm:$0xff]
      %v92 = vld [vmem:[%s89 + $0x10] sm:$0xff]
      %v93 = vld [vmem:[%s89 + $0x18] sm:$0xff]
      %v94 = vld [vmem:[%s89 + $0x20] sm:$0xff]
      %v95 = vld [vmem:[%s89 + $0x28] sm:$0xff]
      %v96 = vld [vmem:[%s89 + $0x30] sm:$0xff]
      %v97 = vld [vmem:[%s89 + $0x38] sm:$0xff]
      %s98 = scalar_lea.vmem [#allocation7], %s79
      %v99 = vld [vmem:[%s98] sm:$0xff]
      %v100 = vld [vmem:[%s98 + $0x8] sm:$0xff]
      %v101 = vld [vmem:[%s98 + $0x10] sm:$0xff]
      %v102 = vld [vmem:[%s98 + $0x18] sm:$0xff]
      %v103 = vld [vmem:[%s98 + $0x20] sm:$0xff]
      %v104 = vld [vmem:[%s98 + $0x28] sm:$0xff]
      %v105 = vld [vmem:[%s98 + $0x30] sm:$0xff]
      %v106 = vld [vmem:[%s98 + $0x38] sm:$0xff]
      %v107 = vsub.f32 %v90, %v81
      %v108 = vsub.f32 %v91, %v82
      %v109 = vsub.f32 %v92, %v83
      %v110 = vsub.f32 %v93, %v84
      %v111 = vsub.f32 %v94, %v85
      %v112 = vsub.f32 %v95, %v86
      %v113 = vsub.f32 %v96, %v87
      %v114 = vsub.f32 %v97, %v88
      %v115 = vsub.f32 0.0, %v107
      %v116 = vsub.f32 0.0, %v108
      %v117 = vsub.f32 0.0, %v109
      %v118 = vsub.f32 0.0, %v110
      %v119 = vsub.f32 0.0, %v111
      %v120 = vsub.f32 0.0, %v112
      %v121 = vsub.f32 0.0, %v113
      %v122 = vsub.f32 0.0, %v114
      %v123 = vmul.f32 %v115, 100.0
      %v124 = vmul.f32 %v116, 100.0
      %v125 = vmul.f32 %v117, 100.0
      %v126 = vmul.f32 %v118, 100.0
      %v127 = vmul.f32 %v119, 100.0
      %v128 = vmul.f32 %v120, 100.0
      %v129 = vmul.f32 %v121, 100.0
      %v130 = vmul.f32 %v122, 100.0
      %vm131 = vcmp.gt.f32.partialorder %v123, 20.0
      %vm132 = vcmp.gt.f32.partialorder %v124, 20.0
      %vm133 = vcmp.gt.f32.partialorder %v125, 20.0
      %vm134 = vcmp.gt.f32.partialorder %v126, 20.0
      %vm135 = vcmp.gt.f32.partialorder %v127, 20.0
      %vm136 = vcmp.gt.f32.partialorder %v128, 20.0
      %vm137 = vcmp.gt.f32.partialorder %v129, 20.0
      %vm138 = vcmp.gt.f32.partialorder %v130, 20.0
      %v139 = vmin.f32 %v123, 20.0
      %v140 = vmin.f32 %v124, 20.0
      %v141 = vmin.f32 %v125, 20.0
      %v142 = vmin.f32 %v126, 20.0
      %v143 = vmin.f32 %v127, 20.0
      %v144 = vmin.f32 %v128, 20.0
      %v145 = vmin.f32 %v129, 20.0
      %v146 = vmin.f32 %v130, 20.0
      %v147 = vmul.f32 %v139, 1.442695
      %v148 = vpow.pop %v147
      %v149 = vmul.f32 %v140, 1.442695
      %v150 = vpow.pop %v149
      %v151 = vmul.f32 %v141, 1.442695
      %v152 = vpow.pop %v151
      %v153 = vmul.f32 %v142, 1.442695
      %v154 = vpow.pop %v153
      %v155 = vmul.f32 %v143, 1.442695
      %v156 = vpow.pop %v155
      %v157 = vmul.f32 %v144, 1.442695
      %v158 = vpow.pop %v157
      %v159 = vmul.f32 %v145, 1.442695
      %v160 = vpow.pop %v159
      %v161 = vmul.f32 %v146, 1.442695
      %v162 = vpow.pop %v161
      %v163 = vadd.f32 %v148, 1.0
      %v164 = vlog2.pop %v163
      %v165 = vmul.f32 %v164, 0.6931472
      %v166 = vmul.f32 -0.5, %v148
      %v167 = vadd.f32 %v166, 1.0
      %v168 = vmul.f32 %v167, %v148
      %v169 = vand.u32 2147483647, %v148
      %vm170 = vcmp.lt.f32.partialorder %v169, 0.0004427343
      %v171 = vsel %vm170, %v168, %v165
      %v172 = vadd.f32 %v150, 1.0
      %v173 = vlog2.pop %v172
      %v174 = vmul.f32 %v173, 0.6931472
      %v175 = vmul.f32 -0.5, %v150
      %v176 = vadd.f32 %v175, 1.0
      %v177 = vmul.f32 %v176, %v150
      %v178 = vand.u32 2147483647, %v150
      %vm179 = vcmp.lt.f32.partialorder %v178, 0.0004427343
      %v180 = vsel %vm179, %v177, %v174
      %v181 = vadd.f32 %v152, 1.0
      %v182 = vlog2.pop %v181
      %v183 = vmul.f32 %v182, 0.6931472
      %v184 = vmul.f32 -0.5, %v152
      %v185 = vadd.f32 %v184, 1.0
      %v186 = vmul.f32 %v185, %v152
      %v187 = vand.u32 2147483647, %v152
      %vm188 = vcmp.lt.f32.partialorder %v187, 0.0004427343
      %v189 = vsel %vm188, %v186, %v183
      %v190 = vadd.f32 %v154, 1.0
      %v191 = vlog2.pop %v190
      %v192 = vmul.f32 %v191, 0.6931472
      %v193 = vmul.f32 -0.5, %v154
      %v194 = vadd.f32 %v193, 1.0
      %v195 = vmul.f32 %v194, %v154
      %v196 = vand.u32 2147483647, %v154
      %vm197 = vcmp.lt.f32.partialorder %v196, 0.0004427343
      %v198 = vsel %vm197, %v195, %v192
      %v199 = vadd.f32 %v156, 1.0
      %v200 = vlog2.pop %v199
      %v201 = vmul.f32 %v200, 0.6931472
      %v202 = vmul.f32 -0.5, %v156
      %v203 = vadd.f32 %v202, 1.0
      %v204 = vmul.f32 %v203, %v156
      %v205 = vand.u32 2147483647, %v156
      %vm206 = vcmp.lt.f32.partialorder %v205, 0.0004427343
      %v207 = vsel %vm206, %v204, %v201
      %v208 = vadd.f32 %v158, 1.0
      %v209 = vlog2.pop %v208
      %v210 = vmul.f32 %v209, 0.6931472
      %v211 = vmul.f32 -0.5, %v158
      %v212 = vadd.f32 %v211, 1.0
      %v213 = vmul.f32 %v212, %v158
      %v214 = vand.u32 2147483647, %v158
      %vm215 = vcmp.lt.f32.partialorder %v214, 0.0004427343
      %v216 = vsel %vm215, %v213, %v210
      %v217 = vadd.f32 %v160, 1.0
      %v218 = vlog2.pop %v217
      %v219 = vmul.f32 %v218, 0.6931472
      %v220 = vmul.f32 -0.5, %v160
      %v221 = vadd.f32 %v220, 1.0
      %v222 = vmul.f32 %v221, %v160
      %v223 = vand.u32 2147483647, %v160
      %vm224 = vcmp.lt.f32.partialorder %v223, 0.0004427343
      %v225 = vsel %vm224, %v222, %v219
      %v226 = vadd.f32 %v162, 1.0
      %v227 = vlog2.pop %v226
      %v228 = vmul.f32 %v227, 0.6931472
      %v229 = vmul.f32 -0.5, %v162
      %v230 = vadd.f32 %v229, 1.0
      %v231 = vmul.f32 %v230, %v162
      %v232 = vand.u32 2147483647, %v162
      %vm233 = vcmp.lt.f32.partialorder %v232, 0.0004427343
      %v234 = vsel %vm233, %v231, %v228
      %v235 = vmul.f32 %v171, 0.01
      %v236 = vmul.f32 %v180, 0.01
      %v237 = vmul.f32 %v189, 0.01
      %v238 = vmul.f32 %v198, 0.01
      %v239 = vmul.f32 %v207, 0.01
      %v240 = vmul.f32 %v216, 0.01
      %v241 = vmul.f32 %v225, 0.01
      %v242 = vmul.f32 %v234, 0.01
      %v243 = vsel %vm131, %v115, %v235
      %v244 = vsel %vm132, %v116, %v236
      %v245 = vsel %vm133, %v117, %v237
      %v246 = vsel %vm134, %v118, %v238
      %v247 = vsel %vm135, %v119, %v239
      %v248 = vsel %vm136, %v120, %v240
      %v249 = vsel %vm137, %v121, %v241
      %v250 = vsel %vm138, %v122, %v242
      %v251 = vmul.f32 %v99, %v107
      %v252 = vmul.f32 %v100, %v108
      %v253 = vmul.f32 %v101, %v109
      %v254 = vmul.f32 %v102, %v110
      %v255 = vmul.f32 %v103, %v111
      %v256 = vmul.f32 %v104, %v112
      %v257 = vmul.f32 %v105, %v113
      %v258 = vmul.f32 %v106, %v114
      %v259 = vadd.f32 %v251, %v243
      %v260 = vadd.f32 %v252, %v244
      %v261 = vadd.f32 %v253, %v245
      %v262 = vadd.f32 %v254, %v246
      %v263 = vadd.f32 %v255, %v247
      %v264 = vadd.f32 %v256, %v248
      %v265 = vadd.f32 %v257, %v249
      %v266 = vadd.f32 %v258, %v250
      %s267 = ssub.s32 80, %s71
      %s268 = ssub.s32 %s267, %s79
      %v269 = vstv %s268
      %vm270 = vcmp.lt.s32.totalorder %v63, %v269
      %vm271 = vcmp.lt.s32.totalorder %v64, %v269
      %vm272 = vcmp.lt.s32.totalorder %v65, %v269
      %vm273 = vcmp.lt.s32.totalorder %v66, %v269
      %vm274 = vcmp.lt.s32.totalorder %v67, %v269
      %vm275 = vcmp.lt.s32.totalorder %v68, %v269
      %vm276 = vcmp.lt.s32.totalorder %v69, %v269
      %vm277 = vcmp.lt.s32.totalorder %v70, %v269
      %v278 = vsel %vm270, %v259, 0.0
      %v279 = vsel %vm271, %v260, 0.0
      %v280 = vsel %vm272, %v261, 0.0
      %v281 = vsel %vm273, %v262, 0.0
      %v282 = vsel %vm274, %v263, 0.0
      %v283 = vsel %vm275, %v264, 0.0
      %v284 = vsel %vm276, %v265, 0.0
      %v285 = vsel %vm277, %v266, 0.0
      %v286 = vadd.f32 %v278, %v279
      %v287 = vadd.f32 %v286, %v280
      %v288 = vadd.f32 %v287, %v281
      %v289 = vadd.f32 %v288, %v282
      %v290 = vadd.f32 %v289, %v283
      %v291 = vadd.f32 %v290, %v284
      %v292 = vadd.f32 %v291, %v285
      %v293 = vadd.f32 %v78, %v292
    $region30: #{tpu_custom_call.1} parent=1 // loop_footer
      %s77 = sadd.s32 1, %s73
    $region31: #{tpu_custom_call.1} parent=1 // loop_footer_branch
      %72 = sbr.rel target = $region27
    $region32: #{tpu_custom_call.1} parent=1 // loop_exit
      _
    %294 = vst [vmem:[#allocation8] sm:$0xff] %v78
    // Predicated region
    $region33: #{tpu_custom_call.1} parent=1 // pred_check
      _
    $region34: #{tpu_custom_call.1} parent=1 // pred_check_branch
      %296 = sbr.rel (0) target = $region36
    $region35: #{tpu_custom_call.1} parent=1 // pred_region
      %298 = vsyncadd [#allocation4], 0
      %s300 = sshll.u32 [#allocation8], 4
      %s301 = int_to_ptr.vmem [resolvable:$true] %s300
      %s302 = sshll.u32 %s3, 4
      %s303 = int_to_ptr.hbm [resolvable:$true] %s302
      %305 = dma.vmem_to_hbm [thread:$0]  %s301, 128, %s303, [#allocation4]
    $region36: #{tpu_custom_call.1} parent=1 // pred_fallthru
      _
    // Predicated region
    $region37: #{tpu_custom_call.1} parent=1 // pred_check
      _
    $region38: #{tpu_custom_call.1} parent=1 // pred_check_branch
      %307 = sbr.rel (0) target = $region40
    $region39: #{tpu_custom_call.1} parent=1 // pred_region
      %309 = dma.done [#allocation4], 128
    $region40: #{tpu_custom_call.1} parent=1 // pred_fallthru
      _
    %310 = vsyncpa [#allocation3], 1
    %311 = vsyncpa [#allocation6], 1
    %312 = vsyncpa [#allocation4], 1

</llo_original>
